<compile_context>
chip_gen: v7x
topology: tpu7x:2x2x1
jax: 0.10.0
libtpu: 0.0.40
codegen_flags: <defaults>
</compile_context>

<pallas_src>
import functools

import jax
import jax.numpy as jnp
from jax.experimental import pallas as pl
from jax.experimental.pallas import tpu as pltpu


def _round_up(x: int, m: int) -> int:
    return ((x + m - 1) // m) * m


def _vmem_capacity_bytes() -> int:
    """Physical per-TensorCore VMEM; conservative (v7x) fallback if the query fails."""
    try:
        return int(pltpu.get_tpu_info().vmem_capacity_bytes)
    except Exception:
        return 64 * 1024 * 1024


def _row_sum_from_lane(ent, l_col):
    """Extract the MXU-computed row sums (ones-column trick) from lane `l_col`."""
    lane = jax.lax.broadcasted_iota(jnp.int32, ent.shape, 1)
    return jnp.sum(jnp.where(lane == l_col, ent, 0.0), axis=1, keepdims=True)


def _normalize(ent, s, out_dtype):
    """entities[s != 0] /= s[s != 0]  (exact division; finalize-only cost)."""
    nz = s != 0.0
    return jnp.where(nz, ent / jnp.where(nz, s, 1.0), ent).astype(out_dtype)


def _user_kernel_resident(x_ref, w_ref, o_ref, *, l_col, sum_in_lane):
    """Single K step: whole entity axis in one block; weight resident in VMEM.

    x_ref: (bm, E)   entity indicators in the caller's dtype (cast in-kernel)
    w_ref: (E, Lp)   compute-dtype weight, lane-padded; column l_col holds ones
    o_ref: (bm, Lp)  lane-dense output tile
    """
    xw = x_ref[...]
    ent = jnp.dot(xw.astype(w_ref.dtype), w_ref[...],
                  preferred_element_type=jnp.float32)
    if sum_in_lane:
        s = _row_sum_from_lane(ent, l_col)           # row sums rode the MXU for free
    else:
        s = jnp.sum(xw, axis=1, dtype=jnp.float32, keepdims=True)
    o_ref[...] = _normalize(ent, s, o_ref.dtype)


def _user_kernel_ktiled(x_ref, w_ref, o_ref, acc_ref, *s_scratch,
                        l_col, sum_in_lane, e_total, bk, needs_mask):
    """Grid = (batch tiles, K tiles over the entity axis). Used only when the
    resident-weight configuration would not fit the VMEM budget (very large E)."""
    k = pl.program_id(1)

    xw = x_ref[...]
    w = w_ref[...]
    if needs_mask:
        # Ragged tail of the entity axis: zero out-of-range columns/rows in-kernel
        # instead of padding the (dominant) x stream in HBM.
        valid = e_total - k * bk
        col = jax.lax.broadcasted_iota(jnp.int32, xw.shape, 1)
        xw = jnp.where(col < valid, xw, jnp.zeros_like(xw))
        row = jax.lax.broadcasted_iota(jnp.int32, w.shape, 0)
        w = jnp.where(row < valid, w, jnp.zeros_like(w))

    part = jnp.dot(xw.astype(w_ref.dtype), w, preferred_element_type=jnp.float32)

    @pl.when(k == 0)
    def _acc_first():            # write the first partial directly: no zero-init pass
        acc_ref[...] = part

    @pl.when(k > 0)
    def _acc_rest():
        acc_ref[...] += part

    if not sum_in_lane:
        s_ref = s_scratch[0]
        sp = jnp.sum(xw, axis=1, dtype=jnp.float32, keepdims=True)

        @pl.when(k == 0)
        def _s_first():
            s_ref[...] = sp

        @pl.when(k > 0)
        def _s_rest():
            s_ref[...] += sp

    @pl.when(k == pl.num_programs(1) - 1)
    def _finalize():
        ent = acc_ref[...]
        if sum_in_lane:
            s = _row_sum_from_lane(ent, l_col)
        else:
            s = s_scratch[0][...]
        o_ref[...] = _normalize(ent, s, o_ref.dtype)


def prepare_weight(weight_linear, compute_dtype=jnp.bfloat16):
    """One-time parameter prep (do this at init, never per forward call):
      * transpose the PyTorch nn.Linear weight (L, E) -> (E, L),
      * cast to the MXU compute dtype (bf16 is exact for 0/1 indicator inputs),
      * lane-pad L to a multiple of 128 and plant a ones column at index L so the
        row sums of x ride the matmul as an extra output lane (free whenever
        L % 128 != 0, since those padding lanes exist anyway).
    """
    w = jnp.asarray(weight_linear)
    latent = w.shape[0]
    wt = w.T.astype(compute_dtype)                       # (E, L)
    lp = _round_up(latent, 128)
    if lp > latent:
        pad = jnp.zeros((wt.shape[0], lp - latent), compute_dtype)
        pad = pad.at[:, 0].set(1.0)                      # ones column -> row sums
        wt = jnp.concatenate([wt, pad], axis=1)
    return wt


@functools.partial(jax.jit,
                   static_argnames=("latent_factor", "bm", "bk", "out_dtype"))
def melu_user_forward(entity_idxs, weight_prepped, latent_factor, *,
                      bm=None, bk=None, out_dtype=jnp.float32):
    """entity_idxs: (B, n_entities) multi-hot indicators.  Read exactly once by the
    kernel and cast on the VPU, so storing it narrow (bf16 / int8) halves the dominant
    HBM stream with no other change.
    weight_prepped: (n_entities, Lp) from prepare_weight().
    Returns (B, latent_factor) in out_dtype (float32 default, matching PyTorch)."""
    x = jnp.asarray(entity_idxs)
    B, E = x.shape
    E_w, Lp = weight_prepped.shape
    assert E_w == E, (E_w, E)
    L = int(latent_factor)
    assert Lp >= L
    sum_in_lane = Lp > L           # ones column planted at index L by prepare_weight

    x_bytes = x.dtype.itemsize
    c_bytes = weight_prepped.dtype.itemsize

    cap = _vmem_capacity_bytes()
    budget = int(cap * 0.70)       # leave headroom for compiler/internal scratch

    # ---- batch tiling: feed MXU/DMA; keep >= 2 "parallel" tiles for v7x megacore ---
    if bm is None:
        bm = min(_round_up(B, 8), 512)
        if B > 8 and pl.cdiv(B, bm) < 2:
            bm = _round_up(pl.cdiv(B, 2), 8)
    bm = max(8, _round_up(int(bm), 8))

    # ---- entity axis: keep the weight resident (single K step) whenever the
    #      double-buffered x tile + weight + output tiles fit the VMEM budget --------
    resident_bytes = (2 * bm * E * x_bytes       # x tile, double-buffered
                      + 2 * E * Lp * c_bytes     # weight (counted as 2 buffers)
                      + 2 * bm * Lp * 4)         # output tile, double-buffered
    single = False
    if bk is None:
        if resident_bytes <= budget:
            single = True
        else:
            fixed = 2 * bm * Lp * 4 + bm * Lp * 4 + bm * 128 * 4
            per_k = 2 * bm * x_bytes + 2 * Lp * c_bytes
            avail = max(budget - fixed, 128 * per_k)
            bk = int(max(128, min(8192, (avail // per_k) // 128 * 128)))
    else:
        bk = max(128, _round_up(int(bk), 128))
    if not single and bk >= E:
        single = True

    # ---- explicit VMEM limit sized from the actual tiles, below physical VMEM ------
    if single:
        needed = resident_bytes
    else:
        needed = (2 * bm * bk * x_bytes + 2 * bk * Lp * c_bytes
                  + 2 * bm * Lp * 4 + bm * Lp * 4 + bm * 128 * 4)
    vmem_limit = int(min(max(needed + needed // 4, 16 * 1024 * 1024),
                         int(cap * 0.85)))

    if single:
        out = pl.pallas_call(
            functools.partial(_user_kernel_resident,
                              l_col=L, sum_in_lane=sum_in_lane),
            out_shape=jax.ShapeDtypeStruct((B, Lp), out_dtype),
            grid_spec=pltpu.PrefetchScalarGridSpec(
                num_scalar_prefetch=0,
                grid=(pl.cdiv(B, bm),),
                in_specs=[
                    # Full-extent entity block: x is never padded or cast in HBM.
                    pl.BlockSpec((bm, E), lambda i: (i, 0)),
                    # Constant block index -> weight DMA'd once, stays resident.
                    pl.BlockSpec((E, Lp), lambda i: (0, 0)),
                ],
                out_specs=pl.BlockSpec((bm, Lp), lambda i: (i, 0)),
            ),
            compiler_params=pltpu.CompilerParams(
                dimension_semantics=("parallel",),
                vmem_limit_bytes=vmem_limit,
            ),
        )(x, weight_prepped)
    else:
        scratch = [pltpu.VMEM((bm, Lp), jnp.float32)]
        if not sum_in_lane:
            scratch.append(pltpu.VMEM((bm, 1), jnp.float32))
        out = pl.pallas_call(
            functools.partial(_user_kernel_ktiled,
                              l_col=L, sum_in_lane=sum_in_lane,
                              e_total=E, bk=bk, needs_mask=(E % bk != 0)),
            out_shape=jax.ShapeDtypeStruct((B, Lp), out_dtype),
            grid_spec=pltpu.PrefetchScalarGridSpec(
                num_scalar_prefetch=0,
                grid=(pl.cdiv(B, bm), pl.cdiv(E, bk)),
                in_specs=[
                    pl.BlockSpec((bm, bk), lambda i, k: (i, k)),
                    pl.BlockSpec((bk, Lp), lambda i, k: (k, 0)),
                ],
                out_specs=pl.BlockSpec((bm, Lp), lambda i, k: (i, 0)),
                scratch_shapes=scratch,
            ),
            compiler_params=pltpu.CompilerParams(
                dimension_semantics=("parallel", "arbitrary"),
                vmem_limit_bytes=vmem_limit,
            ),
        )(x, weight_prepped)

    return out[:, :L] if Lp != L else out


def melu_user_reference(entity_idxs, weight_t):
    """Pure-JAX reference matching the PyTorch forward (weight_t is (E, L))."""
    x = jnp.asarray(entity_idxs).astype(jnp.float32)
    ent = x @ weight_t.astype(jnp.float32)
    s = jnp.sum(x, axis=1, keepdims=True)
    return jnp.where(s != 0.0, ent / jnp.where(s != 0.0, s, 1.0), ent)


if __name__ == "__main__":
    key = jax.random.PRNGKey(0)
    k_w, k_w2, k_x = jax.random.split(key, 3)

    n_entities = 200              # deliberately not a multiple of 128
    batch = 16

    # Multi-hot entity indicators; one all-zero row exercises the s == 0 path.
    x = (jax.random.uniform(k_x, (batch, n_entities)) < 0.1).astype(jnp.float32)
    x = x.at[3].set(0.0)

    def run_case(latent_factor, w_key, **kw):
        bound = 1.0 / jnp.sqrt(jnp.float32(n_entities))
        weight = jax.random.uniform(
            w_key, (latent_factor, n_entities), jnp.float32,
            minval=-bound, maxval=bound)                 # nn.Linear-style init
        weight_prepped = prepare_weight(weight)          # one-time transpose/pad/cast
        out = jax.block_until_ready(
            melu_user_forward(x, weight_prepped, latent_factor=latent_factor, **kw))
        assert out.shape == (batch, latent_factor), out.shape
        wt = weight.T
        # Tight check vs a reference using the same bf16-rounded weight.
        ref_b = melu_user_reference(x, wt.astype(jnp.bfloat16).astype(jnp.float32))
        assert jnp.allclose(out, ref_b, atol=5e-3, rtol=5e-3), \
            float(jnp.max(jnp.abs(out - ref_b)))
        # Loose check vs the exact f32 reference (bf16 weight rounding only).
        ref_f = melu_user_reference(x, wt)
        assert jnp.allclose(out, ref_f, atol=2e-2, rtol=2e-2), \
            float(jnp.max(jnp.abs(out - ref_f)))

    run_case(64, k_w)              # resident-weight path, row sums folded into the MXU
    run_case(64, k_w, bk=128)      # K-tiled path + ragged-tail masking
    run_case(128, k_w2)            # L % 128 == 0 -> in-kernel row sum
    run_case(128, k_w2, bk=128)    # K-tiled path + separate row-sum accumulator

    print("KERNEL_OK")
</pallas_src>

<mosaic_0001>
module attributes {stable_mosaic.version = 11 : i64} {
  func.func @_user_kernel_resident(%arg0: i32, %arg1: memref<8x200xf32, #tpu.memory_space<vmem>>, %arg2: memref<200x128xbf16, #tpu.memory_space<vmem>>, %arg3: memref<8x128xf32, #tpu.memory_space<vmem>>) attributes {dimension_semantics = [#tpu.dimension_semantics<parallel>], iteration_bounds = array<i64: 2>, scalar_prefetch = 0 : i64, scratch_operands = 0 : i64, tpu.core_type = #tpu.core_type<tc>, window_params = [{transform_indices = @transform_0, window_bounds = array<i64: 8, 200>}, {pipeline_mode = #tpu.pipeline_mode<synchronous>, transform_indices = @transform_1, window_bounds = array<i64: 200, 128>}, {transform_indices = @transform_2, window_bounds = array<i64: 8, 128>}]} {
    %c0 = arith.constant 0 : index
    %c0_0 = arith.constant 0 : index
    %0 = vector.load %arg1[%c0, %c0_0] : memref<8x200xf32, #tpu.memory_space<vmem>>, vector<8x200xf32>
    %1 = arith.truncf %0 : vector<8x200xf32> to vector<8x200xbf16>
    %c0_1 = arith.constant 0 : index
    %c0_2 = arith.constant 0 : index
    %2 = vector.load %arg2[%c0_1, %c0_2] : memref<200x128xbf16, #tpu.memory_space<vmem>>, vector<200x128xbf16>
    %cst = arith.constant dense<0.000000e+00> : vector<8x128xf32>
    %3 = tpu.matmul %1, %2, %cst {dimension_numbers = #tpu.dot_dimension_numbers<[1], [0], [0], [1], [0, 0, 1, 1], [], []>} : vector<8x200xbf16>, vector<200x128xbf16>, vector<8x128xf32> -> vector<8x128xf32>
    %4 = tpu.iota {dimensions = array<i32: 1>} : vector<8x128xi32>
    %c64_i32 = arith.constant 64 : i32
    %5 = vector.broadcast %c64_i32 : i32 to vector<8x128xi32>
    %6 = arith.cmpi eq, %4, %5 : vector<8x128xi32>
    %cst_3 = arith.constant 0.000000e+00 : f32
    %7 = vector.broadcast %cst_3 : f32 to vector<8x128xf32>
    %8 = arith.select %6, %3, %7 : vector<8x128xi1>, vector<8x128xf32>
    %cst_4 = arith.constant dense<0.000000e+00> : vector<8xf32>
    %9 = vector.multi_reduction <add>, %8, %cst_4 [1] : vector<8x128xf32> to vector<8xf32>
    %10 = vector.shape_cast %9 : vector<8xf32> to vector<8x1xf32>
    %cst_5 = arith.constant 0.000000e+00 : f32
    %11 = vector.broadcast %cst_5 : f32 to vector<8x1xf32>
    %12 = arith.cmpf one, %10, %11 : vector<8x1xf32>
    %cst_6 = arith.constant 1.000000e+00 : f32
    %13 = vector.broadcast %cst_6 : f32 to vector<8x1xf32>
    %14 = arith.select %12, %10, %13 : vector<8x1xi1>, vector<8x1xf32>
    %15 = vector.broadcast %14 : vector<8x1xf32> to vector<8x128xf32>
    %16 = arith.divf %3, %15 : vector<8x128xf32>
    %17 = vector.shape_cast %12 : vector<8x1xi1> to vector<8x1xi1>
    %18 = vector.broadcast %17 : vector<8x1xi1> to vector<8x128xi1>
    %19 = arith.select %18, %16, %3 : vector<8x128xi1>, vector<8x128xf32>
    %c0_7 = arith.constant 0 : index
    %c0_8 = arith.constant 0 : index
    %20 = vector.load %arg3[%c0_7, %c0_8] : memref<8x128xf32, #tpu.memory_space<vmem>>, vector<8x128xf32>
    tpu.vector_store %arg3[%c0_7, %c0_8], %19 {strides = array<i32>} : memref<8x128xf32, #tpu.memory_space<vmem>>, vector<8x128xf32>,
    return
  }
  func.func @transform_0(%arg0: i32) -> (i32, i32) {
    %c0_i32 = arith.constant 0 : i32
    %c0_i32_0 = arith.constant 0 : i32
    return %arg0, %c0_i32 : i32, i32
  }
  func.func @transform_1(%arg0: i32) -> (i32, i32) {
    %c0_i32 = arith.constant 0 : i32
    %c0_i32_0 = arith.constant 0 : i32
    %c0_i32_1 = arith.constant 0 : i32
    return %c0_i32, %c0_i32_0 : i32, i32
  }
  func.func @transform_2(%arg0: i32) -> (i32, i32) {
    %c0_i32 = arith.constant 0 : i32
    %c0_i32_0 = arith.constant 0 : i32
    return %arg0, %c0_i32 : i32, i32
  }
}

</mosaic_0001>

<llo_original>
// kernel: melu_user_forward.1
$region0: #{melu_user_forward.1}
  #allocation0 [shape = 'u32[]', space=smem, size = 0x4, offset = 0x4, fixed_abs, tag = 'smem constant byte address 0x4 - core index']
  #allocation1 [shape = 'u32[144,128]{1,0:T(1,128)}', space=vmem, size = 0x12000, scoped, tag = 'internal scratch']
  %s0 = inlined_call_operand.hbm [shape: f32[16,200], index: 0, kind: input, shape index: {}]
  %s1 = inlined_call_operand.hbm [shape: bf16[200,128], index: 1, kind: input, shape index: {}]
  %s2 = inlined_call_operand.hbm [shape: f32[16,128], index: 2, kind: output, shape index: {}]
  %s3 = sld [smem:[#allocation0]]
  $region49: #{melu_user_forward.1} parent=0
    _
  %s5 = ssub.s32 1, %s3
  %s6 = scalar_select 0, %s5, %s3
  $region1: #{melu_user_forward.1} parent=0
    #allocation2 [shape = 'u8[16384]{0}', space=vmem, size = 0x4000, scoped, tag = 'input window, operand 0']
    #allocation3 [shape = 's32[2]{0}', space=sflag, size = 0x8, scoped, tag = 'scoped memory for melu_user_forward.1']
    #allocation4 [shape = 's32[2]{0}', space=sflag, size = 0x8, scoped, tag = 'scoped memory for melu_user_forward.1']
    #allocation5 [shape = 'u8[51200]{0}', space=vmem, size = 0xc800, scoped, tag = 'input window, operand 1, single buffered']
    #allocation6 [shape = 's32[1]{0}', space=sflag, size = 0x4, scoped, tag = 'scoped memory for melu_user_forward.1']
    #allocation7 [shape = 'u8[8192]{0}', space=vmem, size = 0x2000, scoped, tag = 'output window, operand 0']
    %7 = vsyncpa [#allocation3], 0
    %s8 = scalar_lea.sflag [#allocation3], 1
    %9 = vsyncpa %s8, 0
    %10 = vsyncpa [#allocation6], 0
    %11 = vsyncpa [#allocation4], 0
    %s12 = scalar_lea.sflag [#allocation4], 1
    %13 = vsyncpa %s12, 0
    loop: start=0, step=1, limit=4
    $region2: #{melu_user_forward.1} parent=1 // loop_pre_header
      _
    $region3: #{melu_user_forward.1} parent=1 // loop_header
      %s15 = sphi 0, %s19
      %p16 = scmp.ge.s32.totalorder %s15, 4
      %s25 = sphi 0, %s27
      %s28 = sphi 0, %s25
      %s29 = sphi 0, %s28
      %s45 = sphi 0, %s29
      %s49 = sphi 0, %s49
      %s51 = sphi 0, %s49
      %s52 = sphi 0, %s51
      %s66 = sphi 0, %s52
      %s72 = sphi 0, %s74
      %s75 = sphi 0, %s72
      %s76 = sphi 0, %s75
      %s92 = sphi 0, %s76
    $region4: #{melu_user_forward.1} parent=1 // loop_header_branch
      %18 = sbr.rel (%p16) target = $region8
    $region5: #{melu_user_forward.1} parent=1 // loop_body
      %s20 = ssub.s32 %s15, 1
      %s21 = ssub.s32 %s15, 2
      %s22 = sadd.s32 %s15, 1
      %s23 = ssub.s32 %s15, %s22
      %p24 = scmp.eq.s32.totalorder %s23, 0
      %s26 = sadd.s32 %s25, 1
      %s27 = scalar_select %p24, %s25, %s26
      %p30 = pneg %p24
      %p31 = scmp.eq.s32.totalorder %s15, 1
      %p32 = por %p30, %p31
      %p33 = scmp.ne.s32.totalorder %s25, %s28
      %p34 = scmp.eq.s32.totalorder %s15, 0
      %p35 = por %p33, %p34
      %p36 = scmp.ne.s32.totalorder %s25, %s28
      %p37 = scmp.eq.s32.totalorder %s20, 1
      %p38 = por %p36, %p37
      %p39 = scmp.ne.s32.totalorder %s28, %s29
      %p40 = scmp.eq.s32.totalorder %s20, 0
      %p41 = por %p39, %p40
      %p42 = scmp.ne.s32.totalorder %s28, %s29
      %p43 = scmp.eq.s32.totalorder %s21, 1
      %p44 = por %p42, %p43
      %p46 = scmp.ne.s32.totalorder %s29, %s45
      %p47 = scmp.eq.s32.totalorder %s21, 0
      %p48 = por %p46, %p47
      %s50 = sadd.s32 %s49, 1
      %p53 = scmp.eq.s32.totalorder %s15, 1
      %p54 = scmp.ne.s32.totalorder %s49, %s51
      %p55 = scmp.eq.s32.totalorder %s15, 0
      %p56 = por %p54, %p55
      %p57 = scmp.ne.s32.totalorder %s49, %s51
      %p58 = scmp.eq.s32.totalorder %s20, 1
      %p59 = por %p57, %p58
      %p60 = scmp.ne.s32.totalorder %s51, %s52
      %p61 = scmp.eq.s32.totalorder %s20, 0
      %p62 = por %p60, %p61
      %p63 = scmp.ne.s32.totalorder %s51, %s52
      %p64 = scmp.eq.s32.totalorder %s21, 1
      %p65 = por %p63, %p64
      %p67 = scmp.ne.s32.totalorder %s52, %s66
      %p68 = scmp.eq.s32.totalorder %s21, 0
      %p69 = por %p67, %p68
      %s70 = ssub.s32 %s15, %s22
      %p71 = scmp.eq.s32.totalorder %s70, 0
      %s73 = sadd.s32 %s72, 1
      %s74 = scalar_select %p71, %s72, %s73
      %p77 = pneg %p71
      %p78 = scmp.eq.s32.totalorder %s15, 1
      %p79 = por %p77, %p78
      %p80 = scmp.ne.s32.totalorder %s72, %s75
      %p81 = scmp.eq.s32.totalorder %s15, 0
      %p82 = por %p80, %p81
      %p83 = scmp.ne.s32.totalorder %s72, %s75
      %p84 = scmp.eq.s32.totalorder %s20, 1
      %p85 = por %p83, %p84
      %p86 = scmp.ne.s32.totalorder %s75, %s76
      %p87 = scmp.eq.s32.totalorder %s20, 0
      %p88 = por %p86, %p87
      %p89 = scmp.ne.s32.totalorder %s75, %s76
      %p90 = scmp.eq.s32.totalorder %s21, 1
      %p91 = por %p89, %p90
      %p93 = scmp.ne.s32.totalorder %s76, %s92
      %p94 = scmp.eq.s32.totalorder %s21, 0
      %p95 = por %p93, %p94
      %p96 = scmp.le.s32.totalorder 1, %s15
      %p97 = scmp.lt.s32.totalorder %s15, 3
      %p98 = pnand %p96, %p97
      %p99 = pneg %p98
      // Predicated region
      $region9: #{melu_user_forward.1} parent=5 // pred_check
        _
      $region10: #{melu_user_forward.1} parent=5 // pred_check_branch
        %101 = sbr.rel (%p98) target = $region12
      $region11: #{melu_user_forward.1} parent=5 // pred_region
        %s102 = ssub.s32 %s15, 1
        // Predicated region
        $region13: #{melu_user_forward.1} parent=11 // pred_check
          %p103 = pneg %p62
        $region14: #{melu_user_forward.1} parent=11 // pred_check_branch
          %105 = sbr.rel (%p103) target = $region16
        $region15: #{melu_user_forward.1} parent=11 // pred_region
          %s107 = ssub.s32 1600, 1600
          %108 = vsyncadd [#allocation6], %s107
          %s109 = sshll.u32 [#allocation5], 4
          %s110 = int_to_ptr.vmem [resolvable:$true] %s109
          %115 = dma.hbm_to_vmem [thread:$0]  %s1, 1600, %s110, [#allocation6], 64, 64, 4
        $region16: #{melu_user_forward.1} parent=11 // pred_fallthru
          _
      $region12: #{melu_user_forward.1} parent=5 // pred_fallthru
        _
      %p116 = scmp.lt.s32.totalorder %s15, 2
      // Predicated region
      $region17: #{melu_user_forward.1} parent=5 // pred_check
        %p117 = pneg %p116
      $region18: #{melu_user_forward.1} parent=5 // pred_check_branch
        %119 = sbr.rel (%p117) target = $region20
      $region19: #{melu_user_forward.1} parent=5 // pred_region
        // Predicated region
        $region21: #{melu_user_forward.1} parent=19 // pred_check
          %p120 = pneg %p35
        $region22: #{melu_user_forward.1} parent=19 // pred_check_branch
          %122 = sbr.rel (%p120) target = $region24
        $region23: #{melu_user_forward.1} parent=19 // pred_region
          %s123 = sand.u32 %s25, 1
          %s124 = scalar_lea.sflag [#allocation3], %s123
          %s125 = sand.u32 %s25, 1
          %s126 = smul.addr %s125, 16
          %s127 = scalar_lea.vmem [#allocation2], %s126
          %s129 = ssub.s32 256, 256
          %130 = vsyncadd %s124, %s129
          %s131 = smul.addr %s15, 2
          %s132 = smul.addr %s131, 128
          %s133 = scalar_lea.hbm %s0, %s132
          %s135 = sshll.u32 %s127, 4
          %s136 = int_to_ptr.vmem [resolvable:$true] %s135
          %138 = dma.hbm_to_vmem [thread:$0]  %s133, 256, %s136, %s124
        $region24: #{melu_user_forward.1} parent=19 // pred_fallthru
          _
      $region20: #{melu_user_forward.1} parent=5 // pred_fallthru
        _
      %p139 = scmp.le.s32.totalorder 1, %s15
      %p140 = scmp.lt.s32.totalorder %s15, 3
      %p141 = pnand %p139, %p140
      %p142 = pneg %p141
      // Predicated region
      $region25: #{melu_user_forward.1} parent=5 // pred_check
        _
      $region26: #{melu_user_forward.1} parent=5 // pred_check_branch
        %144 = sbr.rel (%p141) target = $region28
      $region27: #{melu_user_forward.1} parent=5 // pred_region
        %s145 = ssub.s32 %s15, 1
        %s146 = sand.u32 %s28, 1
        %s147 = scalar_lea.sflag [#allocation3], %s146
        %s148 = sand.u32 %s28, 1
        %s149 = smul.addr %s148, 16
        %s150 = scalar_lea.vmem [#allocation2], %s149
        // Predicated region
        $region29: #{melu_user_forward.1} parent=27 // pred_check
          %p151 = pneg %p41
        $region30: #{melu_user_forward.1} parent=27 // pred_check_branch
          %153 = sbr.rel (%p151) target = $region32
        $region31: #{melu_user_forward.1} parent=27 // pred_region
          %154 = dma.done %s147, 256
        $region32: #{melu_user_forward.1} parent=27 // pred_fallthru
          _
        // Predicated region
        $region33: #{melu_user_forward.1} parent=27 // pred_check
          %p155 = pneg %p62
        $region34: #{melu_user_forward.1} parent=27 // pred_check_branch
          %157 = sbr.rel (%p155) target = $region36
        $region35: #{melu_user_forward.1} parent=27 // pred_region
          %158 = dma.done [#allocation6], 1600
        $region36: #{melu_user_forward.1} parent=27 // pred_fallthru
          _
        %s159 = sand.u32 %s28, 1
        %s160 = scalar_lea.sflag [#allocation3], %s159
        %s161 = sand.u32 %s28, 1
        %s162 = smul.addr %s161, 16
        %s163 = scalar_lea.vmem [#allocation2], %s162
        %p164 = pneg %p41
        %p165 = pneg %p38
        %p166 = pneg %p62
        %p167 = pneg %p59
        %p168 = pneg %p88
        %p169 = pneg %p85
        %s170 = sand.u32 %s75, 1
        %s171 = scalar_lea.sflag [#allocation4], %s170
        %s172 = sand.u32 %s75, 1
        %s173 = smul.addr %s172, 8
        %s174 = scalar_lea.vmem [#allocation7], %s173
        %v176 = vld [vmem:[%s150] sm:$0xff]
        %v177 = vld [vmem:[%s150 + $0x8] sm:$0xff]
        %v178 = vpack.c.bf16 %v176, %v176
        %v179 = vpack.c.bf16 %v177, %v177
        %v180 = vld [vmem:[#allocation5] sm:$0xf]
        %v181 = vld [vmem:[#allocation5 + $0x4] sm:$0xf]
        %v182 = vld [vmem:[#allocation5 + $0x8] sm:$0xf]
        %v183 = vld [vmem:[#allocation5 + $0xc] sm:$0xf]
        %v184 = vld [vmem:[#allocation5 + $0x10] sm:$0xf]
        %v185 = vld [vmem:[#allocation5 + $0x14] sm:$0xf]
        %v186 = vld [vmem:[#allocation5 + $0x18] sm:$0xf]
        %v187 = vld [vmem:[#allocation5 + $0x1c] sm:$0xf]
        %v188 = vld [vmem:[#allocation5 + $0x20] sm:$0xf]
        %v189 = vld [vmem:[#allocation5 + $0x24] sm:$0xf]
        %v190 = vld [vmem:[#allocation5 + $0x28] sm:$0xf]
        %v191 = vld [vmem:[#allocation5 + $0x2c] sm:$0xf]
        %v192 = vld [vmem:[#allocation5 + $0x30] sm:$0xf]
        %v193 = vld [vmem:[#allocation5 + $0x34] sm:$0xf]
        %v194 = vld [vmem:[#allocation5 + $0x38] sm:$0xf]
        %v195 = vld [vmem:[#allocation5 + $0x3c] sm:$0xf]
        %v196 = vld [vmem:[#allocation5 + $0x40] sm:$0xf]
        %v197 = vld [vmem:[#allocation5 + $0x44] sm:$0xf]
        %v198 = vld [vmem:[#allocation5 + $0x48] sm:$0xf]
        %v199 = vld [vmem:[#allocation5 + $0x4c] sm:$0xf]
        %v200 = vld [vmem:[#allocation5 + $0x50] sm:$0xf]
        %v201 = vld [vmem:[#allocation5 + $0x54] sm:$0xf]
        %v202 = vld [vmem:[#allocation5 + $0x58] sm:$0xf]
        %v203 = vld [vmem:[#allocation5 + $0x5c] sm:$0xf]
        %v204 = vld [vmem:[#allocation5 + $0x60] sm:$0xf]
        %v230 = vunpack.c.l.b16 %v180
        %v231 = vunpack.c.l.b16 %v181
        %v232 = vunpack.c.l.b16 %v182
        %v233 = vunpack.c.l.b16 %v183
        %v234 = vunpack.c.l.b16 %v184
        %v235 = vunpack.c.l.b16 %v185
        %v236 = vunpack.c.l.b16 %v186
        %v237 = vunpack.c.l.b16 %v187
        %v238 = vunpack.c.l.b16 %v188
        %v239 = vunpack.c.l.b16 %v189
        %v240 = vunpack.c.l.b16 %v190
        %v241 = vunpack.c.l.b16 %v191
        %v242 = vunpack.c.l.b16 %v192
        %v243 = vunpack.c.l.b16 %v193
        %v244 = vunpack.c.l.b16 %v194
        %v245 = vunpack.c.l.b16 %v195
        %v246 = vunpack.c.l.b16 %v196
        %v247 = vunpack.c.l.b16 %v197
        %v248 = vunpack.c.l.b16 %v198
        %v249 = vunpack.c.l.b16 %v199
        %v250 = vunpack.c.l.b16 %v200
        %v251 = vunpack.c.l.b16 %v201
        %v252 = vunpack.c.l.b16 %v202
        %v253 = vunpack.c.l.b16 %v203
        %v254 = vunpack.c.l.b16 %v204
        %v255 = vpack.c.b16 %v231, %v230
        %v256 = vpack.c.b16 %v233, %v232
        %v257 = vpack.c.b16 %v235, %v234
        %v258 = vpack.c.b16 %v237, %v236
        %v259 = vpack.c.b16 %v239, %v238
        %v260 = vpack.c.b16 %v241, %v240
        %v261 = vpack.c.b16 %v243, %v242
        %v262 = vpack.c.b16 %v245, %v244
        %v263 = vpack.c.b16 %v247, %v246
        %v264 = vpack.c.b16 %v249, %v248
        %v265 = vpack.c.b16 %v251, %v250
        %v266 = vpack.c.b16 %v253, %v252
        %v267 = vpack.c.b16 %v254, %v254
        %vm280 = vcmask 588800
        %v282 = vsel %vm280, %v179, 0
        %vm284 = vcmask 1043456
        %v286 = vsel %vm284, %v267, 0
        %288 = vmatprep.subr.bf16.mxu0 0
        %289 = vmatpush1.bf16.msra.mxu0 %v255
        %290 = vmatprep.subr.bf16.mxu0 0
        %291 = vmatpush1.bf16.msra.mxu0 %v256
        %292 = vmatprep.subr.bf16.mxu0 0
        %293 = vmatpush1.bf16.msra.mxu0 %v257
        %294 = vmatprep.subr.bf16.mxu0 0
        %295 = vmatpush1.bf16.msra.mxu0 %v258
        %296 = vmatprep.subr.bf16.mxu0 0
        %297 = vmatpush1.bf16.msra.mxu0 %v259
        %298 = vmatprep.subr.bf16.mxu0 0
        %299 = vmatpush1.bf16.msra.mxu0 %v260
        %300 = vmatprep.subr.bf16.mxu0 0
        %301 = vmatpush1.bf16.msra.mxu0 %v261
        %302 = vmatprep.subr.bf16.mxu0 0
        %303 = vmatpush1.bf16.msra.mxu0 %v262
        %304 = vmatprep.subr.bf16.mxu0 0
        %305 = vmatpush1.bf16.msra.mxu0 %v263
        %306 = vmatprep.subr.bf16.mxu0 0
        %307 = vmatpush1.bf16.msra.mxu0 %v264
        %308 = vmatprep.subr.bf16.mxu0 0
        %309 = vmatpush1.bf16.msra.mxu0 %v265
        %310 = vmatprep.subr.bf16.mxu0 0
        %311 = vmatpush1.bf16.msra.mxu0 %v266
        %312 = vmatprep.subr.bf16.mxu0 0
        %313 = vmatpush1.bf16.msra.mxu0 %v286
        %314 = vmatprep.subr.bf16.mxu0 0
        %315 = vmatpush1.bf16.msra.mxu0 0
        %316 = vmatprep.subr.bf16.mxu0 0
        %317 = vmatpush1.bf16.msra.mxu0 0
        %318 = vmatprep.subr.bf16.mxu0 0
        %319 = vmatpush1.bf16.msra.mxu0 0
        %320 = vmatprep.mubr.bf16.mxu0 %v282
        %321 = vmatmul.mubr.bf16.gmra.mrb[0].mxu0 %v178
        %v322 = vpop.f32.mrb[0].mxu0
        %v323 = vadd.f32 0.0, %v322
        %v324 = vpop.f32.mrb[0].mxu0
        %v325 = vpop.f32.mrb[0].mxu0
        %v326 = vpop.f32.mrb[0].mxu0
        %327 = vdwg.mxu0
        %v328 = vlaneseq
        %v329 = vand.u32 %v328, 127
        %vm330 = vcmp.eq.s32.totalorder %v329, 64
        %v331 = vsel %vm330, %v323, 0.0
        %332 = vadd.xlane.f32.xlu0 %v331
        %v333 = vpop.xlane.xlu0 %332
        %vm334 = vcmp.ne.f32.partialorder %v333, 0.0
        %v335 = vsel %vm334, %v333, 1.0
        %v336 = vrcp.pop %v335
        %v337 = vmul.f32 %v323, %v336
        %v338 = vsel %vm334, 1, 0
        %vm339 = vcmp.eq.s32.totalorder %v338, 1
        %v340 = vsel %vm339, %v337, %v323
        %341 = vst [vmem:[%s174] sm:$0xff] %v340
        %s342 = sand.u32 %s75, 1
        %s343 = scalar_lea.sflag [#allocation4], %s342
        %s344 = sand.u32 %s75, 1
        %s345 = smul.addr %s344, 8
        %s346 = scalar_lea.vmem [#allocation7], %s345
        // Predicated region
        $region37: #{melu_user_forward.1} parent=27 // pred_check
          %p347 = pneg %p85
        $region38: #{melu_user_forward.1} parent=27 // pred_check_branch
          %349 = sbr.rel (%p347) target = $region40
        $region39: #{melu_user_forward.1} parent=27 // pred_region
          %s351 = ssub.s32 128, 128
          %352 = vsyncadd %s343, %s351
          %s353 = smul.addr %s20, 128
          %s354 = scalar_lea.hbm %s2, %s353
          %s356 = sshll.u32 %s346, 4
          %s357 = int_to_ptr.vmem [resolvable:$true] %s356
          %359 = dma.vmem_to_hbm [thread:$0]  %s357, 128, %s354, %s343
        $region40: #{melu_user_forward.1} parent=27 // pred_fallthru
          _
      $region28: #{melu_user_forward.1} parent=5 // pred_fallthru
        _
      %p360 = scmp.le.s32.totalorder 2, %s15
      // Predicated region
      $region41: #{melu_user_forward.1} parent=5 // pred_check
        %p361 = pneg %p360
      $region42: #{melu_user_forward.1} parent=5 // pred_check_branch
        %363 = sbr.rel (%p361) target = $region44
      $region43: #{melu_user_forward.1} parent=5 // pred_region
        %s364 = ssub.s32 %s15, 2
        // Predicated region
        $region45: #{melu_user_forward.1} parent=43 // pred_check
          %p365 = pneg %p91
        $region46: #{melu_user_forward.1} parent=43 // pred_check_branch
          %367 = sbr.rel (%p365) target = $region48
        $region47: #{melu_user_forward.1} parent=43 // pred_region
          %s368 = sand.u32 %s76, 1
          %s369 = scalar_lea.sflag [#allocation4], %s368
          %s370 = sand.u32 %s76, 1
          %s371 = smul.addr %s370, 8
          %s372 = scalar_lea.vmem [#allocation7], %s371
          %373 = dma.done %s369, 128
        $region48: #{melu_user_forward.1} parent=43 // pred_fallthru
          _
      $region44: #{melu_user_forward.1} parent=5 // pred_fallthru
        _
    $region6: #{melu_user_forward.1} parent=1 // loop_footer
      %s19 = sadd.s32 1, %s15
    $region7: #{melu_user_forward.1} parent=1 // loop_footer_branch
      %14 = sbr.rel target = $region3
    $region8: #{melu_user_forward.1} parent=1 // loop_exit
      _
    %374 = vsyncpa [#allocation3], 1
    %s375 = scalar_lea.sflag [#allocation3], 1
    %376 = vsyncpa %s375, 1
    %377 = vsyncpa [#allocation6], 1
    %378 = vsyncpa [#allocation4], 1
    %s379 = scalar_lea.sflag [#allocation4], 1
    %380 = vsyncpa %s379, 1

</llo_original>
